<compile_context>
chip_gen: v7x
topology: tpu7x:2x2x1
jax: 0.10.0
libtpu: 0.0.40
codegen_flags: <defaults>
</compile_context>

<pallas_src>
import jax
import jax.numpy as jnp
from jax import lax
from jax.experimental import pallas as pl
from jax.experimental.pallas import tpu as pltpu


def _model_kernel(seed_ref, m1x2_ref, o_ref):
    # seed_ref: (1,) int32 in SMEM; m1x2_ref / o_ref: (1, 64) f32 in VMEM.

    # ---- Bernoulli(0.5) keep bit from an integer hash of the per-call seed ----
    # All mixing happens on scalar registers; logical shifts keep the finalizer's
    # avalanche behaviour correct for sequential seeds.
    s = seed_ref[0]
    s = s * jnp.int32(-1640531527) + jnp.int32(12345)      # 0x9E3779B9 LCG step (wraps mod 2^32)
    s = s ^ lax.shift_right_logical(s, 13)
    s = s * jnp.int32(0x45D9F3B)                            # odd multiplicative mix
    s = s ^ lax.shift_right_logical(s, 16)
    keep = s < 0                                            # sign bit: P(keep) = 0.5

    # ---- folded forward: out = keep ? 2*mat1 : 0  (scale already folded into m1x2) ----
    @pl.when(keep)
    def _():
        o_ref[...] = m1x2_ref[...]

    @pl.when(jnp.logical_not(keep))
    def _():
        o_ref[...] = jnp.zeros_like(o_ref)


class Model:
    """JAX/Pallas port of the PyTorch Model (train-mode dropout)."""

    def __init__(self):
        self.mat1 = jnp.arange(64, dtype=jnp.float32).reshape(1, 64)
        self.mat2 = jnp.arange(64, dtype=jnp.float32).reshape(64, 1)
        self.scale_factor = 128
        self.dropout_p = 0.5
        # Constant parameter: dropout scale 1/(1-p) = 2 folded into mat1 once,
        # at setup time (not per forward call).
        self._mat1_x2 = 2.0 * self.mat1
        self._forward = jax.jit(self._forward_impl)

    def _forward_impl(self, x1, seed_arr):
        # x1 (and mat2) are mathematically dead after folding the size-1 softmax
        # (softmax over a length-1 axis == 1.0), so they never reach the kernel.
        del x1
        return pl.pallas_call(
            _model_kernel,
            out_shape=jax.ShapeDtypeStruct(self._mat1_x2.shape, jnp.float32),
            in_specs=[
                pl.BlockSpec(memory_space=pltpu.MemorySpace.SMEM),   # seed    (1,)  int32
                pl.BlockSpec(memory_space=pltpu.MemorySpace.VMEM),   # 2*mat1  (1,64) f32
            ],
            out_specs=pl.BlockSpec(memory_space=pltpu.MemorySpace.VMEM),
        )(seed_arr, self._mat1_x2)

    def __call__(self, x1, seed_arr):
        """x1: (1,64) f32 (accepted to mirror the PyTorch forward);
        seed_arr: device-resident (1,) int32 controlling the dropout mask."""
        return self._forward(x1, seed_arr)


if __name__ == "__main__":
    key = jax.random.PRNGKey(0)
    x1 = jax.random.normal(key, (1, 64), dtype=jnp.float32)

    model = Model()

    # Device-resident per-call seed (fresh seed per forward => fresh dropout mask).
    seed_arr = jnp.asarray([0], dtype=jnp.int32)

    out = model(x1, seed_arr)
    jax.block_until_ready(out)

    assert out.shape == (1, 64) and out.dtype == jnp.float32
    # With the size-1 softmax axis the reference output is either 0 or 2*mat1.
    ok_drop = bool(jnp.allclose(out, jnp.zeros_like(out)))
    ok_keep = bool(jnp.allclose(out, 2.0 * model.mat1))
    assert ok_drop or ok_keep

    print("KERNEL_OK")
</pallas_src>

<mosaic_0001>
module attributes {stable_mosaic.version = 11 : i64} {
  func.func @_model_kernel(%arg0: memref<1xi32, #tpu.memory_space<smem>>, %arg1: memref<1x64xf32, #tpu.memory_space<vmem>>, %arg2: memref<1x64xf32, #tpu.memory_space<vmem>>) attributes {dimension_semantics = [], scalar_prefetch = 0 : i64, scratch_operands = 0 : i64, tpu.core_type = #tpu.core_type<tc>} {
    %c0 = arith.constant 0 : index
    %0 = memref.load %arg0[%c0] : memref<1xi32, #tpu.memory_space<smem>>
    %c-1640531527_i32 = arith.constant -1640531527 : i32
    %1 = arith.muli %0, %c-1640531527_i32 : i32
    %c12345_i32 = arith.constant 12345 : i32
    %2 = arith.addi %1, %c12345_i32 : i32
    %c13_i32 = arith.constant 13 : i32
    %3 = arith.shrui %2, %c13_i32 : i32
    %4 = arith.xori %2, %3 : i32
    %c73244475_i32 = arith.constant 73244475 : i32
    %5 = arith.muli %4, %c73244475_i32 : i32
    %c16_i32 = arith.constant 16 : i32
    %6 = arith.shrui %5, %c16_i32 : i32
    %7 = arith.xori %5, %6 : i32
    %c0_i32 = arith.constant 0 : i32
    %8 = arith.cmpi slt, %7, %c0_i32 : i32
    %9 = arith.extui %8 : i1 to i32
    %c0_i32_0 = arith.constant 0 : i32
    %10 = arith.cmpi ne, %9, %c0_i32_0 : i32
    scf.if %10 {
      %c0_2 = arith.constant 0 : index
      %c0_3 = arith.constant 0 : index
      %14 = vector.load %arg1[%c0_2, %c0_3] : memref<1x64xf32, #tpu.memory_space<vmem>>, vector<1x64xf32>
      %c0_4 = arith.constant 0 : index
      %c0_5 = arith.constant 0 : index
      %15 = vector.load %arg2[%c0_4, %c0_5] : memref<1x64xf32, #tpu.memory_space<vmem>>, vector<1x64xf32>
      tpu.vector_store %arg2[%c0_4, %c0_5], %14 {strides = array<i32>} : memref<1x64xf32, #tpu.memory_space<vmem>>, vector<1x64xf32>,
    } else {
    }
    %true = arith.constant true
    %11 = arith.xori %8, %true : i1
    %12 = arith.extui %11 : i1 to i32
    %c0_i32_1 = arith.constant 0 : i32
    %13 = arith.cmpi ne, %12, %c0_i32_1 : i32
    scf.if %13 {
      %cst = arith.constant 0.000000e+00 : f32
      %14 = vector.broadcast %cst : f32 to vector<1x64xf32>
      %c0_2 = arith.constant 0 : index
      %c0_3 = arith.constant 0 : index
      %15 = vector.load %arg2[%c0_2, %c0_3] : memref<1x64xf32, #tpu.memory_space<vmem>>, vector<1x64xf32>
      tpu.vector_store %arg2[%c0_2, %c0_3], %14 {strides = array<i32>} : memref<1x64xf32, #tpu.memory_space<vmem>>, vector<1x64xf32>,
    } else {
    }
    return
  }
}

</mosaic_0001>

<llo_original>
// kernel: _forward_impl.1
$region0: #{_forward_impl.1}
  #allocation0 [shape = 'u32[]', space=smem, size = 0x4, offset = 0x4, fixed_abs, tag = 'smem constant byte address 0x4 - core index']
  #allocation1 [shape = 'u32[144,128]{1,0:T(1,128)}', space=vmem, size = 0x12000, scoped, tag = 'internal scratch']
  #allocation2 [shape = 's32[1]{0:T(128)S(6)}', space=smem, size = 0x200, scoped, tag = 'scoped memory for _forward_impl.1']
  %s0 = inlined_call_operand.<no memory space> [shape: s32[1], index: 0, kind: input, shape index: {}]
  %s1 = inlined_call_operand.vmem [shape: f32[1,64], index: 1, kind: input, shape index: {}]
  %s2 = inlined_call_operand.hbm [shape: f32[1,64], index: 2, kind: output, shape index: {}]
  %s3 = sld [smem:[#allocation0]]
  $region26: #{_forward_impl.1} parent=0
    _
  %s5 = ssub.s32 1, %s3
  %s6 = scalar_select 0, %s5, %s3
  %7 = sst [smem:[#allocation2]] %s0
  $region1: #{_forward_impl.1} parent=0
    #allocation3 [shape = 'u8[512]{0}', space=vmem, size = 0x400, scoped, tag = 'output window, operand 0, single buffered']
    #allocation4 [shape = 's32[1]{0}', space=sflag, size = 0x4, scoped, tag = 'scoped memory for _forward_impl.1']
    %8 = vsyncpa [#allocation4], 0
    // Predicated region
    $region2: #{_forward_impl.1} parent=1 // pred_check
      _
    $region3: #{_forward_impl.1} parent=1 // pred_check_branch
      %10 = sbr.rel (0) target = $region5
    $region4: #{_forward_impl.1} parent=1 // pred_region
      _
    $region5: #{_forward_impl.1} parent=1 // pred_fallthru
      _
    // Predicated region
    $region6: #{_forward_impl.1} parent=1 // pred_check
      _
    $region7: #{_forward_impl.1} parent=1 // pred_check_branch
      %12 = sbr.rel (0) target = $region9
    $region8: #{_forward_impl.1} parent=1 // pred_region
      _
    $region9: #{_forward_impl.1} parent=1 // pred_fallthru
      _
    %s13 = sld [smem:[#allocation2]]
    %s14 = smul.u32 %s13, 2654435769
    %s15 = sadd.s32 %s14, 12345
    %s16 = sshrl.u32 %s15, 13
    %s17 = sxor.u32 %s15, %s16
    %s18 = smul.u32 %s17, 73244475
    %s19 = sshrl.u32 %s18, 16
    %s20 = sxor.u32 %s18, %s19
    %p21 = scmp.lt.s32.totalorder %s20, 0
    // Predicated region
    $region10: #{_forward_impl.1} parent=1 // pred_check
      %p22 = pneg %p21
    $region11: #{_forward_impl.1} parent=1 // pred_check_branch
      %24 = sbr.rel (%p22) target = $region13
    $region12: #{_forward_impl.1} parent=1 // pred_region
      %v25 = vld [vmem:[%s1] sm:$0x1]
      %vm26 = vcmask 516096
      %27 = vst.msk [vmem:[#allocation3] sm:$0x1] %vm26, %v25
    $region13: #{_forward_impl.1} parent=1 // pred_fallthru
      _
    %p28 = scmp.ge.s32.totalorder %s20, 0
    // Predicated region
    $region14: #{_forward_impl.1} parent=1 // pred_check
      %p29 = pneg %p28
    $region15: #{_forward_impl.1} parent=1 // pred_check_branch
      %31 = sbr.rel (%p29) target = $region17
    $region16: #{_forward_impl.1} parent=1 // pred_region
      %vm32 = vcmask 516096
      %33 = vst.msk [vmem:[#allocation3] sm:$0x1] %vm32, 0.0
    $region17: #{_forward_impl.1} parent=1 // pred_fallthru
      _
    // Predicated region
    $region18: #{_forward_impl.1} parent=1 // pred_check
      _
    $region19: #{_forward_impl.1} parent=1 // pred_check_branch
      %35 = sbr.rel (0) target = $region21
    $region20: #{_forward_impl.1} parent=1 // pred_region
      %s37 = ssub.s32 16, 16
      %38 = vsyncadd [#allocation4], %s37
      %s40 = sshll.u32 [#allocation3], 4
      %s41 = int_to_ptr.vmem [resolvable:$true] %s40
      %43 = dma.vmem_to_hbm [thread:$0]  %s41, 16, %s2, [#allocation4]
    $region21: #{_forward_impl.1} parent=1 // pred_fallthru
      _
    // Predicated region
    $region22: #{_forward_impl.1} parent=1 // pred_check
      _
    $region23: #{_forward_impl.1} parent=1 // pred_check_branch
      %45 = sbr.rel (0) target = $region25
    $region24: #{_forward_impl.1} parent=1 // pred_region
      %46 = dma.done [#allocation4], 16
    $region25: #{_forward_impl.1} parent=1 // pred_fallthru
      _
    %47 = vsyncpa [#allocation4], 1

</llo_original>
